<compile_context>
chip_gen: v6e
topology: v6e:2x2x1
jax: 0.10.0
libtpu: 0.0.40
codegen_flags: <defaults>
</compile_context>

<pallas_src>
import functools

import jax
import jax.numpy as jnp
from jax.experimental import pallas as pl
from jax.experimental.pallas import tpu as pltpu


def _round_up(x: int, m: int) -> int:
    return ((x + m - 1) // m) * m


# ----------------------------- kernels ------------------------------------ #

def _linear_kernel_1k(x_ref, w_ref, o_ref):
    # Single K block: no accumulator scratch needed, direct store.
    o_ref[...] = jnp.dot(
        x_ref[...], w_ref[...], preferred_element_type=jnp.float32
    ).astype(o_ref.dtype)


def _linear_bias_kernel_1k(x_ref, w_ref, b_ref, o_ref):
    acc = jnp.dot(x_ref[...], w_ref[...], preferred_element_type=jnp.float32)
    o_ref[...] = (acc + b_ref[...]).astype(o_ref.dtype)


def _linear_kernel_nk(x_ref, w_ref, o_ref, acc_ref):
    @pl.when(pl.program_id(2) == 0)
    def _():
        acc_ref[...] = jnp.zeros_like(acc_ref)

    acc_ref[...] += jnp.dot(
        x_ref[...], w_ref[...], preferred_element_type=jnp.float32
    )

    @pl.when(pl.program_id(2) == pl.num_programs(2) - 1)
    def _():
        o_ref[...] = acc_ref[...].astype(o_ref.dtype)


def _linear_bias_kernel_nk(x_ref, w_ref, b_ref, o_ref, acc_ref):
    @pl.when(pl.program_id(2) == 0)
    def _():
        acc_ref[...] = jnp.zeros_like(acc_ref)

    acc_ref[...] += jnp.dot(
        x_ref[...], w_ref[...], preferred_element_type=jnp.float32
    )

    @pl.when(pl.program_id(2) == pl.num_programs(2) - 1)
    def _():
        o_ref[...] = (acc_ref[...] + b_ref[...]).astype(o_ref.dtype)


# ----------------------------- wrapper ------------------------------------- #

@functools.partial(jax.jit, static_argnames=("tm", "tn", "tk"))
def _pallas_linear_2d(x, w_t, b=None, *, tm=512, tn=512, tk=512):
    """y = x @ w_t (+ b), with x: [N, dim_in], w_t: [dim_in, dim_out]."""
    N, dim_in = x.shape
    dim_in_w, dim_out = w_t.shape
    assert dim_in == dim_in_w
    out_dtype = x.dtype
    has_bias = b is not None

    # Effective tiles: rows multiple of 16 (bf16 sublanes, covers f32's 8),
    # K / out lanes multiples of 128 (lane-dense), no larger than the problem.
    tm_eff = min(tm, _round_up(N, 16))
    tk_eff = min(tk, _round_up(dim_in, 128))
    tn_eff = min(tn, _round_up(dim_out, 128))

    Mp = _round_up(N, tm_eff)
    Kp = _round_up(dim_in, tk_eff)
    Dp = _round_up(dim_out, tn_eff)

    # Cast to bf16 for the MXU and zero-pad to tile multiples.
    x_c = x.astype(jnp.bfloat16)
    w_c = w_t.astype(jnp.bfloat16)
    if (Mp, Kp) != (N, dim_in):
        x_c = jnp.pad(x_c, ((0, Mp - N), (0, Kp - dim_in)))
    if (Kp, Dp) != (dim_in, dim_out):
        w_c = jnp.pad(w_c, ((0, Kp - dim_in), (0, Dp - dim_out)))

    operands = [x_c, w_c]
    if has_bias:
        b_c = b.astype(jnp.float32).reshape(1, dim_out)
        if Dp != dim_out:
            b_c = jnp.pad(b_c, ((0, 0), (0, Dp - dim_out)))
        operands.append(b_c)

    single_k = (Kp // tk_eff) == 1

    if single_k:
        grid = (Mp // tm_eff, Dp // tn_eff)
        x_spec = pl.BlockSpec((tm_eff, tk_eff), lambda i, j: (i, 0))
        w_spec = pl.BlockSpec((tk_eff, tn_eff), lambda i, j: (0, j))
        b_spec = pl.BlockSpec((1, tn_eff), lambda i, j: (0, j))
        o_spec = pl.BlockSpec((tm_eff, tn_eff), lambda i, j: (i, j))
        scratch = []
        kernel = _linear_bias_kernel_1k if has_bias else _linear_kernel_1k
        semantics = ("parallel", "parallel")
    else:
        grid = (Mp // tm_eff, Dp // tn_eff, Kp // tk_eff)
        x_spec = pl.BlockSpec((tm_eff, tk_eff), lambda i, j, k: (i, k))
        w_spec = pl.BlockSpec((tk_eff, tn_eff), lambda i, j, k: (k, j))
        b_spec = pl.BlockSpec((1, tn_eff), lambda i, j, k: (0, j))
        o_spec = pl.BlockSpec((tm_eff, tn_eff), lambda i, j, k: (i, j))
        scratch = [pltpu.VMEM((tm_eff, tn_eff), jnp.float32)]
        kernel = _linear_bias_kernel_nk if has_bias else _linear_kernel_nk
        semantics = ("parallel", "parallel", "arbitrary")

    in_specs = [x_spec, w_spec] + ([b_spec] if has_bias else [])

    bytes_accessed = (
        x_c.size * 2
        + w_c.size * 2
        + (Dp * 4 if has_bias else 0)
        + Mp * Dp * jnp.dtype(out_dtype).itemsize
    )
    cost = pl.CostEstimate(
        flops=2 * N * dim_in * dim_out,
        transcendentals=0,
        bytes_accessed=bytes_accessed,
    )

    y_pad = pl.pallas_call(
        kernel,
        out_shape=jax.ShapeDtypeStruct((Mp, Dp), out_dtype),
        grid_spec=pltpu.PrefetchScalarGridSpec(
            num_scalar_prefetch=0,
            grid=grid,
            in_specs=in_specs,
            out_specs=o_spec,
            scratch_shapes=scratch,
        ),
        compiler_params=pltpu.CompilerParams(
            dimension_semantics=semantics,
        ),
        cost_estimate=cost,
    )(*operands)

    if (Mp, Dp) != (N, dim_out):
        y_pad = y_pad[:N, :dim_out]
    return y_pad


def pallas_linear(x, w_t, bias=None, *, tm=512, tn=512, tk=512):
    """nn.Linear forward for arbitrary leading dims: y = x @ w_t (+ bias)."""
    dim_in = x.shape[-1]
    dim_out = w_t.shape[1]
    lead = x.shape[:-1]
    x2 = x.reshape(-1, dim_in)
    y2 = _pallas_linear_2d(x2, w_t, bias, tm=tm, tn=tn, tk=tk)
    return y2.reshape(*lead, dim_out)


class LinearPallas:
    """Mirror of the PyTorch `Linear` wrapper module (bias=False default)."""

    def __init__(self, dim_in, dim_out, bias=False, *, key=None, **kwargs):
        if key is None:
            key = jax.random.PRNGKey(0)
        k_w, k_b = jax.random.split(key)
        # nn.Linear: weight (dim_out, dim_in), U(-1/sqrt(fan_in), 1/sqrt(fan_in)).
        # Stored transposed ([dim_in, dim_out]) and in bf16 so the hot path
        # streams half the bytes.
        bound = 1.0 / (dim_in ** 0.5)
        w = jax.random.uniform(
            k_w, (dim_out, dim_in), dtype=jnp.float32, minval=-bound, maxval=bound
        )
        self.w_t = w.T.astype(jnp.bfloat16)  # [dim_in, dim_out]
        self.bias = (
            jax.random.uniform(
                k_b, (dim_out,), dtype=jnp.float32, minval=-bound, maxval=bound
            )
            if bias
            else None
        )

    def __call__(self, batch):
        if isinstance(batch, jnp.ndarray):
            return pallas_linear(batch, self.w_t, self.bias)
        # graph-batch path: update node_feature attribute in place
        batch.node_feature = pallas_linear(batch.node_feature, self.w_t, self.bias)
        return batch


if __name__ == "__main__":
    key = jax.random.PRNGKey(0)
    keys = jax.random.split(key, 5)

    # 1) raw-tensor path, module default (bias=False), single-K kernel.
    N, dim_in, dim_out = 64, 32, 64
    x = jax.random.normal(keys[0], (N, dim_in), dtype=jnp.float32)
    layer = LinearPallas(dim_in, dim_out, bias=False, key=keys[1])
    y = jax.block_until_ready(layer(x))
    y_ref = x @ layer.w_t.astype(jnp.float32)
    assert y.shape == (N, dim_out)
    assert y.dtype == x.dtype
    assert jnp.allclose(y, y_ref, atol=2e-2, rtol=2e-2), (
        float(jnp.max(jnp.abs(y - y_ref)))
    )

    # 2) graph-batch path (duck-typed .node_feature), non-aligned row count.
    class _Batch:
        pass

    batch = _Batch()
    batch.node_feature = jax.random.normal(keys[2], (50, dim_in), dtype=jnp.float32)
    nf_ref = batch.node_feature @ layer.w_t.astype(jnp.float32)
    batch = layer(batch)
    jax.block_until_ready(batch.node_feature)
    assert batch.node_feature.shape == (50, dim_out)
    assert jnp.allclose(batch.node_feature, nf_ref, atol=2e-2, rtol=2e-2)

    # 3) K-tiled accumulator path (+ bias) exercised with a small tk.
    N2, di2, do2 = 32, 256, 128
    x2 = jax.random.normal(keys[3], (N2, di2), dtype=jnp.float32)
    layer2 = LinearPallas(di2, do2, bias=True, key=keys[4])
    y2 = jax.block_until_ready(pallas_linear(x2, layer2.w_t, layer2.bias, tk=128))
    y2_ref = x2 @ layer2.w_t.astype(jnp.float32) + layer2.bias
    assert y2.shape == (N2, do2)
    assert jnp.allclose(y2, y2_ref, atol=2e-2, rtol=2e-2), (
        float(jnp.max(jnp.abs(y2 - y2_ref)))
    )

    print("KERNEL_OK")
</pallas_src>

<mosaic_0001>
module attributes {stable_mosaic.version = 11 : i64} {
  func.func @_linear_kernel_1k(%arg0: i32, %arg1: i32, %arg2: memref<64x128xbf16, #tpu.memory_space<vmem>>, %arg3: memref<128x128xbf16, #tpu.memory_space<vmem>>, %arg4: memref<64x128xf32, #tpu.memory_space<vmem>>) attributes {dimension_semantics = [#tpu.dimension_semantics<parallel>, #tpu.dimension_semantics<parallel>], iteration_bounds = array<i64: 1, 1>, scalar_prefetch = 0 : i64, scratch_operands = 0 : i64, tpu.core_type = #tpu.core_type<tc>, window_params = [{transform_indices = @transform_0, window_bounds = array<i64: 64, 128>}, {transform_indices = @transform_1, window_bounds = array<i64: 128, 128>}, {transform_indices = @transform_2, window_bounds = array<i64: 64, 128>}]} {
    %c0 = arith.constant 0 : index
    %c0_0 = arith.constant 0 : index
    %0 = vector.load %arg2[%c0, %c0_0] : memref<64x128xbf16, #tpu.memory_space<vmem>>, vector<64x128xbf16>
    %c0_1 = arith.constant 0 : index
    %c0_2 = arith.constant 0 : index
    %1 = vector.load %arg3[%c0_1, %c0_2] : memref<128x128xbf16, #tpu.memory_space<vmem>>, vector<128x128xbf16>
    %cst = arith.constant dense<0.000000e+00> : vector<64x128xf32>
    %2 = tpu.matmul %0, %1, %cst {dimension_numbers = #tpu.dot_dimension_numbers<[1], [0], [0], [1], [0, 0, 1, 1], [], []>} : vector<64x128xbf16>, vector<128x128xbf16>, vector<64x128xf32> -> vector<64x128xf32>
    %c0_3 = arith.constant 0 : index
    %c0_4 = arith.constant 0 : index
    %3 = vector.load %arg4[%c0_3, %c0_4] : memref<64x128xf32, #tpu.memory_space<vmem>>, vector<64x128xf32>
    tpu.vector_store %arg4[%c0_3, %c0_4], %2 {strides = array<i32>} : memref<64x128xf32, #tpu.memory_space<vmem>>, vector<64x128xf32>,
    return
  }
  func.func @transform_0(%arg0: i32, %arg1: i32) -> (i32, i32) {
    %c0_i32 = arith.constant 0 : i32
    %c0_i32_0 = arith.constant 0 : i32
    return %arg0, %c0_i32 : i32, i32
  }
  func.func @transform_1(%arg0: i32, %arg1: i32) -> (i32, i32) {
    %c0_i32 = arith.constant 0 : i32
    %c0_i32_0 = arith.constant 0 : i32
    return %c0_i32, %arg1 : i32, i32
  }
  func.func @transform_2(%arg0: i32, %arg1: i32) -> (i32, i32) {
    %c0_i32 = arith.constant 0 : i32
    return %arg0, %arg1 : i32, i32
  }
}

</mosaic_0001>

<llo_original>
// kernel: _pallas_linear_2d.1
$region0: #{_pallas_linear_2d.1}
  #allocation0 [shape = 'u32[]', space=smem, size = 0x4, offset = 0x4, fixed_abs, tag = 'smem constant byte address 0x4 - core index']
  #allocation1 [shape = 'u32[144,128]{1,0:T(1,128)}', space=vmem, size = 0x12000, scoped, tag = 'internal scratch']
  %s0 = inlined_call_operand.vmem [shape: bf16[64,128], index: 0, kind: input, shape index: {}]
  %s1 = inlined_call_operand.vmem [shape: bf16[128,128], index: 1, kind: input, shape index: {}]
  %s2 = inlined_call_operand.hbm [shape: f32[64,128], index: 2, kind: output, shape index: {}]
  %s3 = sld [smem:[#allocation0]]
  $region18: #{_pallas_linear_2d.1} parent=0
    _
  %s5 = ssub.s32 1, %s3
  %s6 = scalar_select 0, %s5, %s3
  $region1: #{_pallas_linear_2d.1} parent=0
    #allocation2 [shape = 'u8[32768]{0}', space=vmem, size = 0x8000, scoped, tag = 'output window, operand 0, single buffered']
    #allocation3 [shape = 's32[1]{0}', space=sflag, size = 0x4, scoped, tag = 'scoped memory for _pallas_linear_2d.1']
    %7 = vsyncpa [#allocation3], 0
    // Predicated region
    $region2: #{_pallas_linear_2d.1} parent=1 // pred_check
      _
    $region3: #{_pallas_linear_2d.1} parent=1 // pred_check_branch
      %9 = sbr.rel (0) target = $region5
    $region4: #{_pallas_linear_2d.1} parent=1 // pred_region
      _
    $region5: #{_pallas_linear_2d.1} parent=1 // pred_fallthru
      _
    // Predicated region
    $region6: #{_pallas_linear_2d.1} parent=1 // pred_check
      _
    $region7: #{_pallas_linear_2d.1} parent=1 // pred_check_branch
      %11 = sbr.rel (0) target = $region9
    $region8: #{_pallas_linear_2d.1} parent=1 // pred_region
      _
    $region9: #{_pallas_linear_2d.1} parent=1 // pred_fallthru
      _
    %v13 = vld [vmem:[%s0] sm:$0xf]
    %v14 = vld [vmem:[%s0 + $0x4] sm:$0xf]
    %v15 = vld [vmem:[%s0 + $0x8] sm:$0xf]
    %v16 = vld [vmem:[%s0 + $0xc] sm:$0xf]
    %v17 = vld [vmem:[%s0 + $0x10] sm:$0xf]
    %v18 = vld [vmem:[%s0 + $0x14] sm:$0xf]
    %v19 = vld [vmem:[%s0 + $0x18] sm:$0xf]
    %v20 = vld [vmem:[%s0 + $0x1c] sm:$0xf]
    %v21 = vld [vmem:[%s1] sm:$0xf]
    %v22 = vld [vmem:[%s1 + $0x4] sm:$0xf]
    %v23 = vld [vmem:[%s1 + $0x8] sm:$0xf]
    %v24 = vld [vmem:[%s1 + $0xc] sm:$0xf]
    %v25 = vld [vmem:[%s1 + $0x10] sm:$0xf]
    %v26 = vld [vmem:[%s1 + $0x14] sm:$0xf]
    %v27 = vld [vmem:[%s1 + $0x18] sm:$0xf]
    %v28 = vld [vmem:[%s1 + $0x1c] sm:$0xf]
    %v29 = vld [vmem:[%s1 + $0x20] sm:$0xf]
    %v30 = vld [vmem:[%s1 + $0x24] sm:$0xf]
    %v31 = vld [vmem:[%s1 + $0x28] sm:$0xf]
    %v32 = vld [vmem:[%s1 + $0x2c] sm:$0xf]
    %v33 = vld [vmem:[%s1 + $0x30] sm:$0xf]
    %v34 = vld [vmem:[%s1 + $0x34] sm:$0xf]
    %v35 = vld [vmem:[%s1 + $0x38] sm:$0xf]
    %v36 = vld [vmem:[%s1 + $0x3c] sm:$0xf]
    %v45 = vunpack.c.l.b16 %v13
    %v46 = vunpack.c.l.b16 %v14
    %v47 = vunpack.c.l.b16 %v15
    %v48 = vunpack.c.l.b16 %v16
    %v49 = vunpack.c.l.b16 %v17
    %v50 = vunpack.c.l.b16 %v18
    %v51 = vunpack.c.l.b16 %v19
    %v52 = vunpack.c.l.b16 %v20
    %v53 = vpack.c.b16 %v46, %v45
    %v54 = vpack.c.b16 %v48, %v47
    %v55 = vpack.c.b16 %v50, %v49
    %v56 = vpack.c.b16 %v52, %v51
    %v77 = vunpack.c.l.b16 %v21
    %v78 = vunpack.c.l.b16 %v22
    %v79 = vunpack.c.l.b16 %v23
    %v80 = vunpack.c.l.b16 %v24
    %v81 = vunpack.c.l.b16 %v25
    %v82 = vunpack.c.l.b16 %v26
    %v83 = vunpack.c.l.b16 %v27
    %v84 = vunpack.c.l.b16 %v28
    %v85 = vunpack.c.l.b16 %v29
    %v86 = vunpack.c.l.b16 %v30
    %v87 = vunpack.c.l.b16 %v31
    %v88 = vunpack.c.l.b16 %v32
    %v89 = vunpack.c.l.b16 %v33
    %v90 = vunpack.c.l.b16 %v34
    %v91 = vunpack.c.l.b16 %v35
    %v92 = vunpack.c.l.b16 %v36
    %v93 = vpack.c.b16 %v78, %v77
    %v94 = vpack.c.b16 %v80, %v79
    %v95 = vpack.c.b16 %v82, %v81
    %v96 = vpack.c.b16 %v84, %v83
    %v97 = vpack.c.b16 %v86, %v85
    %v98 = vpack.c.b16 %v88, %v87
    %v99 = vpack.c.b16 %v90, %v89
    %v100 = vpack.c.b16 %v92, %v91
    %109 = vmatprep.subr.bf16.mxu0 0
    %110 = vmatpush1.bf16.msra.mxu0 %v100
    %111 = vmatprep.subr.bf16.mxu0 0
    %112 = vmatpush1.bf16.msra.mxu0 %v99
    %113 = vmatprep.subr.bf16.mxu0 0
    %114 = vmatpush1.bf16.msra.mxu0 %v98
    %115 = vmatprep.subr.bf16.mxu0 0
    %116 = vmatpush1.bf16.msra.mxu0 %v97
    %117 = vmatprep.subr.bf16.mxu0 0
    %118 = vmatpush1.bf16.msra.mxu0 %v96
    %119 = vmatprep.subr.bf16.mxu0 0
    %120 = vmatpush1.bf16.msra.mxu0 %v95
    %121 = vmatprep.subr.bf16.mxu0 0
    %122 = vmatpush1.bf16.msra.mxu0 %v94
    %123 = vmatprep.subr.bf16.mxu0 0
    %124 = vmatpush1.bf16.msra.mxu0 %v93
    %125 = vmatprep.subr.bf16.mxu0 0
    %126 = vmatpush2.bf16.msra.mxu0 0
    %127 = vmatprep.subr.bf16.mxu0 0
    %128 = vmatpush2.bf16.msra.mxu0 0
    %129 = vmatprep.subr.bf16.mxu0 0
    %130 = vmatpush2.bf16.msra.mxu0 0
    %131 = vmatprep.subr.bf16.mxu0 0
    %132 = vmatpush2.bf16.msra.mxu0 0
    %133 = vmatprep.subr.bf16.mxu0 0
    %134 = vmatpush2.bf16.msra.mxu0 0
    %135 = vmatprep.subr.bf16.mxu0 0
    %136 = vmatpush2.bf16.msra.mxu0 0
    %137 = vmatprep.subr.bf16.mxu0 0
    %138 = vmatpush2.bf16.msra.mxu0 0
    %139 = vmatprep.subr.bf16.mxu0 0
    %140 = vmatpush2.bf16.msra.mxu0 0
    %141 = vmatprep.mubr.bf16.mxu0 0
    %142 = vmatmul.mubr.bf16.gmra.mxu0 %v53
    %v143 = vpop.f32.mrf.mxu0
    %v144 = vadd.f32 0.0, %v143
    %v145 = vpop.f32.mrf.mxu0
    %v146 = vpop.f32.mrf.mxu0
    %v147 = vadd.f32 0.0, %v146
    %v148 = vpop.f32.mrf.mxu0
    %149 = vmatprep.mubr.bf16.mxu0 0
    %150 = vmatmul.mubr.bf16.gmra.mxu0 %v54
    %v151 = vpop.f32.mrf.mxu0
    %v152 = vadd.f32 0.0, %v151
    %v153 = vpop.f32.mrf.mxu0
    %v154 = vpop.f32.mrf.mxu0
    %v155 = vadd.f32 0.0, %v154
    %v156 = vpop.f32.mrf.mxu0
    %157 = vmatprep.mubr.bf16.mxu0 0
    %158 = vmatmul.mubr.bf16.gmra.mxu0 %v55
    %v159 = vpop.f32.mrf.mxu0
    %v160 = vadd.f32 0.0, %v159
    %v161 = vpop.f32.mrf.mxu0
    %v162 = vpop.f32.mrf.mxu0
    %v163 = vadd.f32 0.0, %v162
    %v164 = vpop.f32.mrf.mxu0
    %165 = vmatprep.mubr.bf16.mxu0 0
    %166 = vmatmul.mubr.bf16.gmra.mxu0 %v56
    %v167 = vpop.f32.mrf.mxu0
    %v168 = vadd.f32 0.0, %v167
    %v169 = vpop.f32.mrf.mxu0
    %v170 = vpop.f32.mrf.mxu0
    %v171 = vadd.f32 0.0, %v170
    %v172 = vpop.f32.mrf.mxu0
    %173 = vdwg.mxu0
    %174 = vst [vmem:[#allocation2] sm:$0xff] %v144
    %175 = vst [vmem:[#allocation2 + $0x8] sm:$0xff] %v147
    %176 = vst [vmem:[#allocation2 + $0x10] sm:$0xff] %v152
    %177 = vst [vmem:[#allocation2 + $0x18] sm:$0xff] %v155
    %178 = vst [vmem:[#allocation2 + $0x20] sm:$0xff] %v160
    %179 = vst [vmem:[#allocation2 + $0x28] sm:$0xff] %v163
    %180 = vst [vmem:[#allocation2 + $0x30] sm:$0xff] %v168
    %181 = vst [vmem:[#allocation2 + $0x38] sm:$0xff] %v171
    // Predicated region
    $region10: #{_pallas_linear_2d.1} parent=1 // pred_check
      _
    $region11: #{_pallas_linear_2d.1} parent=1 // pred_check_branch
      %183 = sbr.rel (0) target = $region13
    $region12: #{_pallas_linear_2d.1} parent=1 // pred_region
      %s185 = ssub.s32 1024, 1024
      %186 = vsyncadd [#allocation3], %s185
      %s187 = sshll.u32 [#allocation2], 4
      %s188 = int_to_ptr.vmem [resolvable:$true] %s187
      %193 = dma.vmem_to_hbm [thread:$0]  %s188, 1024, %s2, [#allocation3], 128, 128, 8
    $region13: #{_pallas_linear_2d.1} parent=1 // pred_fallthru
      _
    // Predicated region
    $region14: #{_pallas_linear_2d.1} parent=1 // pred_check
      _
    $region15: #{_pallas_linear_2d.1} parent=1 // pred_check_branch
      %195 = sbr.rel (0) target = $region17
    $region16: #{_pallas_linear_2d.1} parent=1 // pred_region
      %196 = dma.done [#allocation3], 1024
    $region17: #{_pallas_linear_2d.1} parent=1 // pred_fallthru
      _
    %197 = vsyncpa [#allocation3], 1

</llo_original>
